<compile_context>
chip_gen: v7x
topology: tpu7x:2x2x1
jax: 0.10.0
libtpu: 0.0.40
codegen_flags: <defaults>
</compile_context>

<pallas_src>
import numpy as np
import jax
import jax.numpy as jnp
from jax.experimental import pallas as pl
from jax.experimental.pallas import tpu as pltpu


# ----------------------------------------------------------------------------
# Spatial operator matrices (host-side glue; shapes are static & tiny)
# ----------------------------------------------------------------------------
def pool_matrix(s, H, W):
    """AdaptiveAvgPool2d((s, s)) as a (s*s, H*W) matrix (PyTorch bin rules)."""
    def axis(s_, L):
        m = np.zeros((s_, L), dtype=np.float32)
        for o in range(s_):
            start = (o * L) // s_
            end = ((o + 1) * L + s_ - 1) // s_
            m[o, start:end] = 1.0 / (end - start)
        return m
    ph, pw = axis(s, H), axis(s, W)
    return np.einsum("ir,jc->ijrc", ph, pw).reshape(s * s, H * W).astype(np.float32)


def upsample_matrix(s, H, W):
    """Bilinear upsample (s,s)->(H,W), align_corners=False, as (H*W, s*s)."""
    def axis(L_out, L_in):
        m = np.zeros((L_out, L_in), dtype=np.float32)
        if L_in == 1:
            m[:, 0] = 1.0
            return m
        scale = L_in / L_out
        for o in range(L_out):
            src = max((o + 0.5) * scale - 0.5, 0.0)
            i0 = min(int(np.floor(src)), L_in - 1)
            i1 = min(i0 + 1, L_in - 1)
            frac = src - i0
            m[o, i0] += 1.0 - frac
            m[o, i1] += frac
        return m
    uh, uw = axis(H, s), axis(W, s)
    return np.einsum("ri,cj->rcij", uh, uw).reshape(H * W, s * s).astype(np.float32)


# ----------------------------------------------------------------------------
# Fused PSP kernel (channel-major, stage-batched)
# ----------------------------------------------------------------------------
def make_psp_kernel(num_stages, stage_offsets, stage_slices, compute_dtype):
    """Kernel refs: x_full, x_tile, PT_cat, UT_cat_tile, M_stack, Mx, bias, out."""
    S = num_stages

    def kernel(xf_ref, xt_ref, pt_ref, ut_ref, m_ref, mx_ref, b_ref, o_ref):
        x_full = xf_ref[0]                                     # (C, HW)
        x_tile = xt_ref[0]                                     # (C, tHW)

        # identity branch folded with its bottleneck column block: (outF,C)@(C,tHW)
        acc = jnp.dot(mx_ref[...], x_tile,
                      preferred_element_type=jnp.float32)      # (outF, tHW) f32

        # ONE pooled contraction for all pyramid stages: (C,HW)@(HW,s2p) -> (C,s2p)
        pooled_cat = jnp.dot(x_full, pt_ref[...],
                             preferred_element_type=jnp.float32)
        pooled_cat = pooled_cat.astype(compute_dtype)

        # four tiny folded-conv dots on static column slices -> z_cat (outF, s2p)
        z_parts = []
        for s in range(S):                                     # static loop
            off, sz = stage_offsets[s], stage_slices[s]
            z_parts.append(jnp.dot(m_ref[s], pooled_cat[:, off:off + sz],
                                   preferred_element_type=jnp.float32))
        z_cat = jnp.concatenate(z_parts, axis=-1).astype(compute_dtype)

        # ONE upsample contraction for all stages: (outF,s2p)@(s2p,tHW), lane-dense
        acc = acc + jnp.dot(z_cat, ut_ref[...],
                            preferred_element_type=jnp.float32)

        acc = acc + b_ref[...]                                 # (outF,1) bcast, f32
        o_ref[0] = jnp.maximum(acc, 0.0).astype(o_ref.dtype)

    return kernel


def psp_forward(x_nchw, stage_weights, bneck_w, bneck_b, sizes=(1, 2, 3, 6),
                compute_dtype=jnp.bfloat16, tile_hw=128):
    N, C, H, W = x_nchw.shape
    HW = H * W
    S = len(sizes)
    outF = bneck_w.shape[0]

    # HW tiling for the second (parallel) grid axis; fall back to full HW if it
    # does not divide cleanly into 128-multiples.
    if tile_hw is None or tile_hw <= 0 or tile_hw % 128 != 0 or HW % tile_hw != 0:
        tile_hw = HW
    n_tiles = HW // tile_hw

    # channel-major, zero-copy reshape (no transpose); bf16 operands for the MXU
    x_ncl = x_nchw.reshape(N, C, HW).astype(compute_dtype)

    # Fold each stage 1x1 conv into its slice of the bottleneck weight (in f32, exact),
    # THEN cast.  Concat order in PyTorch: [stage_0, ..., stage_{S-1}, identity].
    Ms = []
    for i, Wc in enumerate(stage_weights):
        Wb_slice = bneck_w[:, i * C:(i + 1) * C].astype(jnp.float32)   # (outF, C)
        Ms.append(Wb_slice @ Wc.astype(jnp.float32))                   # (outF, C)
    M_stack = jnp.stack(Ms).astype(compute_dtype)                      # (S, outF, C)
    Mx = bneck_w[:, S * C:(S + 1) * C].astype(jnp.float32).astype(compute_dtype)
    bias = bneck_b.reshape(outF, 1).astype(jnp.float32)                # (outF, 1) f32

    # Concatenated spatial operators, padded ONCE to a multiple of 8 on the s^2 axis.
    s2_list = [s * s for s in sizes]
    offsets = list(np.cumsum([0] + s2_list[:-1]))
    s2_tot = sum(s2_list)
    s2p_tot = s2_tot + ((-s2_tot) % 8)
    # absorb the pad into the last stage's slice (pad cols of PT/UT are zero -> exact)
    stage_slices = list(s2_list)
    stage_slices[-1] += s2p_tot - s2_tot

    PT_cat = np.zeros((HW, s2p_tot), np.float32)
    UT_cat = np.zeros((s2p_tot, HW), np.float32)
    for s, off, s2 in zip(sizes, offsets, s2_list):
        PT_cat[:, off:off + s2] = pool_matrix(s, H, W).T
        UT_cat[off:off + s2, :] = upsample_matrix(s, H, W).T
    PT_cat = jnp.asarray(PT_cat, dtype=compute_dtype)
    UT_cat = jnp.asarray(UT_cat, dtype=compute_dtype)

    in_specs = [
        pl.BlockSpec((1, C, HW), lambda n, j: (n, 0, 0)),        # x full (pooling)
        pl.BlockSpec((1, C, tile_hw), lambda n, j: (n, 0, j)),   # x HW tile (identity)
        pl.BlockSpec((HW, s2p_tot), lambda n, j: (0, 0)),        # PT_cat
        pl.BlockSpec((s2p_tot, tile_hw), lambda n, j: (0, j)),   # UT_cat tile
        pl.BlockSpec((S, outF, C), lambda n, j: (0, 0, 0)),      # folded stage weights
        pl.BlockSpec((outF, C), lambda n, j: (0, 0)),            # folded identity weight
        pl.BlockSpec((outF, 1), lambda n, j: (0, 0)),            # bias
    ]
    # TODO(synk): at real sizes mark the constant operands pipeline_mode=pl.Buffered(1)
    # (single-buffered resident weights) to halve their VMEM footprint on v7x.

    itemsize = jnp.dtype(compute_dtype).itemsize
    flops_step = (2 * C * HW * s2p_tot
                  + sum(2 * outF * C * sz for sz in stage_slices)
                  + 2 * outF * s2p_tot * tile_hw
                  + 2 * outF * C * tile_hw)
    cost = pl.CostEstimate(
        flops=int(N * n_tiles * flops_step),
        transcendentals=0,
        bytes_accessed=int(
            N * n_tiles * (C * HW + C * tile_hw + HW * s2p_tot + s2p_tot * tile_hw
                           + S * outF * C + outF * C) * itemsize
            + N * n_tiles * outF * 4
            + N * HW * outF * 4))

    out = pl.pallas_call(
        make_psp_kernel(S, offsets, stage_slices, compute_dtype),
        out_shape=jax.ShapeDtypeStruct((N, outF, HW), jnp.float32),
        grid=(N, n_tiles),
        in_specs=in_specs,
        out_specs=pl.BlockSpec((1, outF, tile_hw), lambda n, j: (n, 0, j)),
        compiler_params=pltpu.CompilerParams(
            dimension_semantics=("parallel", "parallel")),
        cost_estimate=cost,
    )(x_ncl, x_ncl, PT_cat, UT_cat, M_stack, Mx, bias)

    return out.reshape(N, outF, H, W)        # already NCHW — free reshape


# ----------------------------------------------------------------------------
# Pure-JAX f32 reference (unfused, unfolded) for correctness checking
# ----------------------------------------------------------------------------
def psp_reference(x_nchw, stage_weights, bneck_w, bneck_b, sizes=(1, 2, 3, 6)):
    N, C, H, W = x_nchw.shape
    x = jnp.transpose(x_nchw, (0, 2, 3, 1)).reshape(N, H * W, C).astype(jnp.float32)
    priors = []
    for s, Wc in zip(sizes, stage_weights):
        P = jnp.asarray(pool_matrix(s, H, W))
        U = jnp.asarray(upsample_matrix(s, H, W))
        pooled = jnp.einsum("pq,nqc->npc", P, x)
        conv = jnp.einsum("npc,dc->npd", pooled, Wc)
        priors.append(jnp.einsum("qp,npc->nqc", U, conv))
    priors.append(x)
    cat = jnp.concatenate(priors, axis=-1)
    out = jnp.maximum(jnp.einsum("nqc,oc->nqo", cat, bneck_w) + bneck_b, 0.0)
    return out.reshape(N, H, W, -1).transpose(0, 3, 1, 2)


if __name__ == "__main__":
    # Small shapes consistent with the module: features=8, out_features=32,
    # sizes=(1,2,3,6), input x: (N=2, C=8, H=16, W=16)
    sizes = (1, 2, 3, 6)
    features, out_features = 8, 32
    N, H, W = 2, 16, 16

    key = jax.random.PRNGKey(0)
    keys = jax.random.split(key, len(sizes) + 3)
    x = jax.random.normal(keys[0], (N, features, H, W), dtype=jnp.float32)
    # per-stage 1x1 conv weights (out_C, in_C), no bias (matches _make_stage)
    stage_weights = [
        0.1 * jax.random.normal(keys[1 + i], (features, features), dtype=jnp.float32)
        for i in range(len(sizes))
    ]
    # bottleneck 1x1 conv: weight (out_features, features*(len(sizes)+1)), bias
    bneck_w = 0.1 * jax.random.normal(
        keys[-2], (out_features, features * (len(sizes) + 1)), dtype=jnp.float32)
    bneck_b = 0.1 * jax.random.normal(keys[-1], (out_features,), dtype=jnp.float32)

    ref = psp_reference(x, stage_weights, bneck_w, bneck_b, sizes)

    # f32 path: bit-level-close to the unfused reference
    out_f32 = psp_forward(x, stage_weights, bneck_w, bneck_b, sizes,
                          compute_dtype=jnp.float32, tile_hw=128)
    out_f32 = jax.block_until_ready(out_f32)
    assert out_f32.shape == (N, out_features, H, W), out_f32.shape
    np.testing.assert_allclose(np.asarray(out_f32), np.asarray(ref),
                               rtol=1e-4, atol=1e-4)

    # bf16 operands (default, per perf review): f32 accumulation, loose tolerance
    out_bf16 = psp_forward(x, stage_weights, bneck_w, bneck_b, sizes,
                           compute_dtype=jnp.bfloat16, tile_hw=128)
    out_bf16 = jax.block_until_ready(out_bf16)
    assert out_bf16.shape == (N, out_features, H, W), out_bf16.shape
    np.testing.assert_allclose(np.asarray(out_bf16), np.asarray(ref),
                               rtol=3e-2, atol=3e-2)

    print("KERNEL_OK")
</pallas_src>

<mosaic_0001>
module attributes {stable_mosaic.version = 11 : i64} {
  func.func @kernel(%arg0: i32, %arg1: i32, %arg2: memref<1x8x256xf32, #tpu.memory_space<vmem>>, %arg3: memref<1x8x128xf32, #tpu.memory_space<vmem>>, %arg4: memref<256x56xf32, #tpu.memory_space<vmem>>, %arg5: memref<56x128xf32, #tpu.memory_space<vmem>>, %arg6: memref<4x32x8xf32, #tpu.memory_space<vmem>>, %arg7: memref<32x8xf32, #tpu.memory_space<vmem>>, %arg8: memref<32x1xf32, #tpu.memory_space<vmem>>, %arg9: memref<1x32x128xf32, #tpu.memory_space<vmem>>) attributes {dimension_semantics = [#tpu.dimension_semantics<parallel>, #tpu.dimension_semantics<parallel>], iteration_bounds = array<i64: 2, 2>, scalar_prefetch = 0 : i64, scratch_operands = 0 : i64, tpu.core_type = #tpu.core_type<tc>, window_params = [{transform_indices = @transform_0, window_bounds = array<i64: 1, 8, 256>}, {transform_indices = @transform_1, window_bounds = array<i64: 1, 8, 128>}, {pipeline_mode = #tpu.pipeline_mode<synchronous>, transform_indices = @transform_2, window_bounds = array<i64: 256, 56>}, {transform_indices = @transform_3, window_bounds = array<i64: 56, 128>}, {pipeline_mode = #tpu.pipeline_mode<synchronous>, transform_indices = @transform_4, window_bounds = array<i64: 4, 32, 8>}, {pipeline_mode = #tpu.pipeline_mode<synchronous>, transform_indices = @transform_5, window_bounds = array<i64: 32, 8>}, {pipeline_mode = #tpu.pipeline_mode<synchronous>, transform_indices = @transform_6, window_bounds = array<i64: 32, 1>}, {transform_indices = @transform_7, window_bounds = array<i64: 1, 32, 128>}]} {
    %c0 = arith.constant 0 : index
    %c0_0 = arith.constant 0 : index
    %c0_1 = arith.constant 0 : index
    %0 = vector.load %arg2[%c0, %c0_0, %c0_1] : memref<1x8x256xf32, #tpu.memory_space<vmem>>, vector<1x8x256xf32>
    %1 = vector.shape_cast %0 : vector<1x8x256xf32> to vector<8x256xf32>
    %c0_2 = arith.constant 0 : index
    %c0_3 = arith.constant 0 : index
    %c0_4 = arith.constant 0 : index
    %2 = vector.load %arg3[%c0_2, %c0_3, %c0_4] : memref<1x8x128xf32, #tpu.memory_space<vmem>>, vector<1x8x128xf32>
    %3 = vector.shape_cast %2 : vector<1x8x128xf32> to vector<8x128xf32>
    %c0_5 = arith.constant 0 : index
    %c0_6 = arith.constant 0 : index
    %4 = vector.load %arg7[%c0_5, %c0_6] : memref<32x8xf32, #tpu.memory_space<vmem>>, vector<32x8xf32>
    %cst = arith.constant dense<0.000000e+00> : vector<32x128xf32>
    %5 = tpu.matmul %4, %3, %cst {dimension_numbers = #tpu.dot_dimension_numbers<[1], [0], [0], [1], [0, 0, 1, 1], [], []>} : vector<32x8xf32>, vector<8x128xf32>, vector<32x128xf32> -> vector<32x128xf32>
    %c0_7 = arith.constant 0 : index
    %c0_8 = arith.constant 0 : index
    %6 = vector.load %arg4[%c0_7, %c0_8] : memref<256x56xf32, #tpu.memory_space<vmem>>, vector<256x56xf32>
    %cst_9 = arith.constant dense<0.000000e+00> : vector<8x56xf32>
    %7 = tpu.matmul %1, %6, %cst_9 {dimension_numbers = #tpu.dot_dimension_numbers<[1], [0], [0], [1], [0, 0, 1, 1], [], []>} : vector<8x256xf32>, vector<256x56xf32>, vector<8x56xf32> -> vector<8x56xf32>
    %c0_10 = arith.constant 0 : index
    %c0_11 = arith.constant 0 : index
    %c0_12 = arith.constant 0 : index
    %8 = vector.load %arg6[%c0_10, %c0_11, %c0_12] : memref<4x32x8xf32, #tpu.memory_space<vmem>>, vector<1x32x8xf32>
    %9 = vector.shape_cast %8 : vector<1x32x8xf32> to vector<32x8xf32>
    %10 = vector.extract_strided_slice %7 {offsets = [0, 0], sizes = [8, 1], strides = [1, 1]} : vector<8x56xf32> to vector<8x1xf32>
    %cst_13 = arith.constant dense<0.000000e+00> : vector<32x1xf32>
    %11 = tpu.matmul %9, %10, %cst_13 {dimension_numbers = #tpu.dot_dimension_numbers<[1], [0], [0], [1], [0, 0, 1, 1], [], []>} : vector<32x8xf32>, vector<8x1xf32>, vector<32x1xf32> -> vector<32x1xf32>
    %c1 = arith.constant 1 : index
    %c0_14 = arith.constant 0 : index
    %c0_15 = arith.constant 0 : index
    %12 = vector.load %arg6[%c1, %c0_14, %c0_15] : memref<4x32x8xf32, #tpu.memory_space<vmem>>, vector<1x32x8xf32>
    %13 = vector.shape_cast %12 : vector<1x32x8xf32> to vector<32x8xf32>
    %14 = vector.extract_strided_slice %7 {offsets = [0, 1], sizes = [8, 4], strides = [1, 1]} : vector<8x56xf32> to vector<8x4xf32>
    %cst_16 = arith.constant dense<0.000000e+00> : vector<32x4xf32>
    %15 = tpu.matmul %13, %14, %cst_16 {dimension_numbers = #tpu.dot_dimension_numbers<[1], [0], [0], [1], [0, 0, 1, 1], [], []>} : vector<32x8xf32>, vector<8x4xf32>, vector<32x4xf32> -> vector<32x4xf32>
    %c2 = arith.constant 2 : index
    %c0_17 = arith.constant 0 : index
    %c0_18 = arith.constant 0 : index
    %16 = vector.load %arg6[%c2, %c0_17, %c0_18] : memref<4x32x8xf32, #tpu.memory_space<vmem>>, vector<1x32x8xf32>
    %17 = vector.shape_cast %16 : vector<1x32x8xf32> to vector<32x8xf32>
    %18 = vector.extract_strided_slice %7 {offsets = [0, 5], sizes = [8, 9], strides = [1, 1]} : vector<8x56xf32> to vector<8x9xf32>
    %cst_19 = arith.constant dense<0.000000e+00> : vector<32x9xf32>
    %19 = tpu.matmul %17, %18, %cst_19 {dimension_numbers = #tpu.dot_dimension_numbers<[1], [0], [0], [1], [0, 0, 1, 1], [], []>} : vector<32x8xf32>, vector<8x9xf32>, vector<32x9xf32> -> vector<32x9xf32>
    %c3 = arith.constant 3 : index
    %c0_20 = arith.constant 0 : index
    %c0_21 = arith.constant 0 : index
    %20 = vector.load %arg6[%c3, %c0_20, %c0_21] : memref<4x32x8xf32, #tpu.memory_space<vmem>>, vector<1x32x8xf32>
    %21 = vector.shape_cast %20 : vector<1x32x8xf32> to vector<32x8xf32>
    %22 = vector.extract_strided_slice %7 {offsets = [0, 14], sizes = [8, 42], strides = [1, 1]} : vector<8x56xf32> to vector<8x42xf32>
    %cst_22 = arith.constant dense<0.000000e+00> : vector<32x42xf32>
    %23 = tpu.matmul %21, %22, %cst_22 {dimension_numbers = #tpu.dot_dimension_numbers<[1], [0], [0], [1], [0, 0, 1, 1], [], []>} : vector<32x8xf32>, vector<8x42xf32>, vector<32x42xf32> -> vector<32x42xf32>
    %24 = tpu.concatenate %11, %15, %19, %23 in 1 : vector<32x1xf32>, vector<32x4xf32>, vector<32x9xf32>, vector<32x42xf32> -> vector<32x56xf32>
    %c0_23 = arith.constant 0 : index
    %c0_24 = arith.constant 0 : index
    %25 = vector.load %arg5[%c0_23, %c0_24] : memref<56x128xf32, #tpu.memory_space<vmem>>, vector<56x128xf32>
    %cst_25 = arith.constant dense<0.000000e+00> : vector<32x128xf32>
    %26 = tpu.matmul %24, %25, %cst_25 {dimension_numbers = #tpu.dot_dimension_numbers<[1], [0], [0], [1], [0, 0, 1, 1], [], []>} : vector<32x56xf32>, vector<56x128xf32>, vector<32x128xf32> -> vector<32x128xf32>
    %27 = arith.addf %5, %26 : vector<32x128xf32>
    %c0_26 = arith.constant 0 : index
    %c0_27 = arith.constant 0 : index
    %28 = vector.load %arg8[%c0_26, %c0_27] : memref<32x1xf32, #tpu.memory_space<vmem>>, vector<32x1xf32>
    %29 = vector.broadcast %28 : vector<32x1xf32> to vector<32x128xf32>
    %30 = arith.addf %27, %29 : vector<32x128xf32>
    %cst_28 = arith.constant 0.000000e+00 : f32
    %31 = vector.broadcast %cst_28 : f32 to vector<32x128xf32>
    %32 = arith.maximumf %30, %31 : vector<32x128xf32>
    %c0_29 = arith.constant 0 : index
    %c0_30 = arith.constant 0 : index
    %c0_31 = arith.constant 0 : index
    %33 = vector.load %arg9[%c0_29, %c0_30, %c0_31] : memref<1x32x128xf32, #tpu.memory_space<vmem>>, vector<1x32x128xf32>
    %34 = vector.shape_cast %33 : vector<1x32x128xf32> to vector<32x128xf32>
    %35 = vector.shape_cast %32 : vector<32x128xf32> to vector<1x32x128xf32>
    tpu.vector_store %arg9[%c0_29, %c0_30, %c0_31], %35 {strides = array<i32>} : memref<1x32x128xf32, #tpu.memory_space<vmem>>, vector<1x32x128xf32>,
    return
  }
  func.func @transform_0(%arg0: i32, %arg1: i32) -> (i32, i32, i32) {
    %c0_i32 = arith.constant 0 : i32
    %c0_i32_0 = arith.constant 0 : i32
    %c0_i32_1 = arith.constant 0 : i32
    return %arg0, %c0_i32, %c0_i32_0 : i32, i32, i32
  }
  func.func @transform_1(%arg0: i32, %arg1: i32) -> (i32, i32, i32) {
    %c0_i32 = arith.constant 0 : i32
    %c0_i32_0 = arith.constant 0 : i32
    return %arg0, %c0_i32, %arg1 : i32, i32, i32
  }
  func.func @transform_2(%arg0: i32, %arg1: i32) -> (i32, i32) {
    %c0_i32 = arith.constant 0 : i32
    %c0_i32_0 = arith.constant 0 : i32
    %c0_i32_1 = arith.constant 0 : i32
    return %c0_i32, %c0_i32_0 : i32, i32
  }
  func.func @transform_3(%arg0: i32, %arg1: i32) -> (i32, i32) {
    %c0_i32 = arith.constant 0 : i32
    %c0_i32_0 = arith.constant 0 : i32
    return %c0_i32, %arg1 : i32, i32
  }
  func.func @transform_4(%arg0: i32, %arg1: i32) -> (i32, i32, i32) {
    %c0_i32 = arith.constant 0 : i32
    %c0_i32_0 = arith.constant 0 : i32
    %c0_i32_1 = arith.constant 0 : i32
    %c0_i32_2 = arith.constant 0 : i32
    return %c0_i32, %c0_i32_0, %c0_i32_1 : i32, i32, i32
  }
  func.func @transform_5(%arg0: i32, %arg1: i32) -> (i32, i32) {
    %c0_i32 = arith.constant 0 : i32
    %c0_i32_0 = arith.constant 0 : i32
    %c0_i32_1 = arith.constant 0 : i32
    return %c0_i32, %c0_i32_0 : i32, i32
  }
  func.func @transform_6(%arg0: i32, %arg1: i32) -> (i32, i32) {
    %c0_i32 = arith.constant 0 : i32
    %c0_i32_0 = arith.constant 0 : i32
    %c0_i32_1 = arith.constant 0 : i32
    return %c0_i32, %c0_i32_0 : i32, i32
  }
  func.func @transform_7(%arg0: i32, %arg1: i32) -> (i32, i32, i32) {
    %c0_i32 = arith.constant 0 : i32
    %c0_i32_0 = arith.constant 0 : i32
    return %arg0, %c0_i32, %arg1 : i32, i32, i32
  }
}

</mosaic_0001>

<llo_original>
// kernel: tpu_custom_call.1
$region0: #{tpu_custom_call.1}
  #allocation0 [shape = 'u32[]', space=smem, size = 0x4, offset = 0x4, fixed_abs, tag = 'smem constant byte address 0x4 - core index']
  #allocation1 [shape = 'u32[144,128]{1,0:T(1,128)}', space=vmem, size = 0x12000, scoped, tag = 'internal scratch']
  %s0 = inlined_call_operand.vmem [shape: f32[2,8,256], index: 0, kind: input, shape index: {}]
  %s1 = inlined_call_operand.vmem [shape: f32[2,8,256], index: 1, kind: input, shape index: {}]
  %s2 = inlined_call_operand.vmem [shape: f32[256,56], index: 2, kind: input, shape index: {}]
  %s3 = inlined_call_operand.vmem [shape: f32[56,256], index: 3, kind: input, shape index: {}]
  %s4 = inlined_call_operand.vmem [shape: f32[4,32,8], index: 4, kind: input, shape index: {}]
  %s5 = inlined_call_operand.vmem [shape: f32[32,8], index: 5, kind: input, shape index: {}]
  %s6 = inlined_call_operand.vmem [shape: f32[32,1], index: 6, kind: input, shape index: {}]
  %s7 = inlined_call_operand.hbm [shape: f32[2,32,256], index: 7, kind: output, shape index: {}]
  %s8 = sld [smem:[#allocation0]]
  $region99: #{tpu_custom_call.1} parent=0
    _
  %s10 = ssub.s32 1, %s8
  %s11 = scalar_select 0, %s10, %s8
  $region1: #{tpu_custom_call.1} parent=0
    #allocation2 [shape = 'u8[57344]{0}', space=vmem, size = 0xe000, scoped, tag = 'input window, operand 3']
    #allocation3 [shape = 'u8[32768]{0}', space=vmem, size = 0x8000, scoped, tag = 'output window, operand 0']
    #allocation4 [shape = 's32[2]{0}', space=sflag, size = 0x8, scoped, tag = 'scoped memory for tpu_custom_call.1']
    %12 = vsyncpa [#allocation4], 0
    %s13 = scalar_lea.sflag [#allocation4], 1
    %14 = vsyncpa %s13, 0
    loop: start=0, step=1, limit=6
    $region2: #{tpu_custom_call.1} parent=1 // loop_pre_header
      _
    $region3: #{tpu_custom_call.1} parent=1 // loop_header
      %s16 = sphi 0, %s20
      %p17 = scmp.ge.s32.totalorder %s16, 6
      %s23 = sphi 0, %s35
      %s24 = sphi 0, %s31
      %s25 = sphi 0, %s23
      %s26 = sphi 0, %s24
      %s27 = sphi 0, %s25
      %s28 = sphi 0, %s26
      %s38 = sphi 0, %s40
      %s41 = sphi 0, %s38
      %s42 = sphi 0, %s41
      %s58 = sphi 0, %s42
      %s66 = sphi 0, %s68
      %s69 = sphi 0, %s66
      %s70 = sphi 0, %s69
      %s86 = sphi 0, %s70
      %s90 = sphi 0, %s90
      %s92 = sphi 0, %s90
      %s93 = sphi 0, %s92
      %s107 = sphi 0, %s93
      %s113 = sphi 0, %s115
      %s116 = sphi 0, %s113
      %s117 = sphi 0, %s116
      %s133 = sphi 0, %s117
      %s137 = sphi 0, %s137
      %s139 = sphi 0, %s137
      %s140 = sphi 0, %s139
      %s154 = sphi 0, %s140
      %s158 = sphi 0, %s158
      %s160 = sphi 0, %s158
      %s161 = sphi 0, %s160
      %s175 = sphi 0, %s161
      %s179 = sphi 0, %s179
      %s181 = sphi 0, %s179
      %s182 = sphi 0, %s181
      %s196 = sphi 0, %s182
      %s204 = sphi 0, %s206
      %s207 = sphi 0, %s204
      %s208 = sphi 0, %s207
      %s224 = sphi 0, %s208
    $region4: #{tpu_custom_call.1} parent=1 // loop_header_branch
      %19 = sbr.rel (%p17) target = $region8
    $region5: #{tpu_custom_call.1} parent=1 // loop_body
      %s21 = ssub.s32 %s16, 1
      %s22 = ssub.s32 %s16, 2
      %s29 = sadd.s32 1, %s24
      %p30 = scmp.ge.s32.totalorder %s29, 2
      %s31 = scalar_select %p30, 0, %s29
      %s32 = sadd.s32 1, %s23
      %s33 = scalar_select %p30, %s32, %s23
      %p34 = scmp.ge.s32.totalorder %s33, 2
      %s35 = scalar_select %p34, 0, %s33
      %s36 = ssub.s32 %s23, %s35
      %p37 = scmp.eq.s32.totalorder %s36, 0
      %s39 = sadd.s32 %s38, 1
      %s40 = scalar_select %p37, %s38, %s39
      %p43 = pneg %p37
      %p44 = scmp.eq.s32.totalorder %s16, 3
      %p45 = por %p43, %p44
      %p46 = scmp.ne.s32.totalorder %s38, %s41
      %p47 = scmp.eq.s32.totalorder %s16, 0
      %p48 = por %p46, %p47
      %p49 = scmp.ne.s32.totalorder %s38, %s41
      %p50 = scmp.eq.s32.totalorder %s21, 3
      %p51 = por %p49, %p50
      %p52 = scmp.ne.s32.totalorder %s41, %s42
      %p53 = scmp.eq.s32.totalorder %s21, 0
      %p54 = por %p52, %p53
      %p55 = scmp.ne.s32.totalorder %s41, %s42
      %p56 = scmp.eq.s32.totalorder %s22, 3
      %p57 = por %p55, %p56
      %p59 = scmp.ne.s32.totalorder %s42, %s58
      %p60 = scmp.eq.s32.totalorder %s22, 0
      %p61 = por %p59, %p60
      %s62 = ssub.s32 %s23, %s35
      %s63 = ssub.s32 %s24, %s31
      %s64 = sor.u32 %s62, %s63
      %p65 = scmp.eq.s32.totalorder %s64, 0
      %s67 = sadd.s32 %s66, 1
      %s68 = scalar_select %p65, %s66, %s67
      %p71 = pneg %p65
      %p72 = scmp.eq.s32.totalorder %s16, 3
      %p73 = por %p71, %p72
      %p74 = scmp.ne.s32.totalorder %s66, %s69
      %p75 = scmp.eq.s32.totalorder %s16, 0
      %p76 = por %p74, %p75
      %p77 = scmp.ne.s32.totalorder %s66, %s69
      %p78 = scmp.eq.s32.totalorder %s21, 3
      %p79 = por %p77, %p78
      %p80 = scmp.ne.s32.totalorder %s69, %s70
      %p81 = scmp.eq.s32.totalorder %s21, 0
      %p82 = por %p80, %p81
      %p83 = scmp.ne.s32.totalorder %s69, %s70
      %p84 = scmp.eq.s32.totalorder %s22, 3
      %p85 = por %p83, %p84
      %p87 = scmp.ne.s32.totalorder %s70, %s86
      %p88 = scmp.eq.s32.totalorder %s22, 0
      %p89 = por %p87, %p88
      %s91 = sadd.s32 %s90, 1
      %p94 = scmp.eq.s32.totalorder %s16, 3
      %p95 = scmp.ne.s32.totalorder %s90, %s92
      %p96 = scmp.eq.s32.totalorder %s16, 0
      %p97 = por %p95, %p96
      %p98 = scmp.ne.s32.totalorder %s90, %s92
      %p99 = scmp.eq.s32.totalorder %s21, 3
      %p100 = por %p98, %p99
      %p101 = scmp.ne.s32.totalorder %s92, %s93
      %p102 = scmp.eq.s32.totalorder %s21, 0
      %p103 = por %p101, %p102
      %p104 = scmp.ne.s32.totalorder %s92, %s93
      %p105 = scmp.eq.s32.totalorder %s22, 3
      %p106 = por %p104, %p105
      %p108 = scmp.ne.s32.totalorder %s93, %s107
      %p109 = scmp.eq.s32.totalorder %s22, 0
      %p110 = por %p108, %p109
      %s111 = ssub.s32 %s24, %s31
      %p112 = scmp.eq.s32.totalorder %s111, 0
      %s114 = sadd.s32 %s113, 1
      %s115 = scalar_select %p112, %s113, %s114
      %p118 = pneg %p112
      %p119 = scmp.eq.s32.totalorder %s16, 3
      %p120 = por %p118, %p119
      %p121 = scmp.ne.s32.totalorder %s113, %s116
      %p122 = scmp.eq.s32.totalorder %s16, 0
      %p123 = por %p121, %p122
      %p124 = scmp.ne.s32.totalorder %s113, %s116
      %p125 = scmp.eq.s32.totalorder %s21, 3
      %p126 = por %p124, %p125
      %p127 = scmp.ne.s32.totalorder %s116, %s117
      %p128 = scmp.eq.s32.totalorder %s21, 0
      %p129 = por %p127, %p128
      %p130 = scmp.ne.s32.totalorder %s116, %s117
      %p131 = scmp.eq.s32.totalorder %s22, 3
      %p132 = por %p130, %p131
      %p134 = scmp.ne.s32.totalorder %s117, %s133
      %p135 = scmp.eq.s32.totalorder %s22, 0
      %p136 = por %p134, %p135
      %s138 = sadd.s32 %s137, 1
      %p141 = scmp.eq.s32.totalorder %s16, 3
      %p142 = scmp.ne.s32.totalorder %s137, %s139
      %p143 = scmp.eq.s32.totalorder %s16, 0
      %p144 = por %p142, %p143
      %p145 = scmp.ne.s32.totalorder %s137, %s139
      %p146 = scmp.eq.s32.totalorder %s21, 3
      %p147 = por %p145, %p146
      %p148 = scmp.ne.s32.totalorder %s139, %s140
      %p149 = scmp.eq.s32.totalorder %s21, 0
      %p150 = por %p148, %p149
      %p151 = scmp.ne.s32.totalorder %s139, %s140
      %p152 = scmp.eq.s32.totalorder %s22, 3
      %p153 = por %p151, %p152
      %p155 = scmp.ne.s32.totalorder %s140, %s154
      %p156 = scmp.eq.s32.totalorder %s22, 0
      %p157 = por %p155, %p156
      %s159 = sadd.s32 %s158, 1
      %p162 = scmp.eq.s32.totalorder %s16, 3
      %p163 = scmp.ne.s32.totalorder %s158, %s160
      %p164 = scmp.eq.s32.totalorder %s16, 0
      %p165 = por %p163, %p164
      %p166 = scmp.ne.s32.totalorder %s158, %s160
      %p167 = scmp.eq.s32.totalorder %s21, 3
      %p168 = por %p166, %p167
      %p169 = scmp.ne.s32.totalorder %s160, %s161
      %p170 = scmp.eq.s32.totalorder %s21, 0
      %p171 = por %p169, %p170
      %p172 = scmp.ne.s32.totalorder %s160, %s161
      %p173 = scmp.eq.s32.totalorder %s22, 3
      %p174 = por %p172, %p173
      %p176 = scmp.ne.s32.totalorder %s161, %s175
      %p177 = scmp.eq.s32.totalorder %s22, 0
      %p178 = por %p176, %p177
      %s180 = sadd.s32 %s179, 1
      %p183 = scmp.eq.s32.totalorder %s16, 3
      %p184 = scmp.ne.s32.totalorder %s179, %s181
      %p185 = scmp.eq.s32.totalorder %s16, 0
      %p186 = por %p184, %p185
      %p187 = scmp.ne.s32.totalorder %s179, %s181
      %p188 = scmp.eq.s32.totalorder %s21, 3
      %p189 = por %p187, %p188
      %p190 = scmp.ne.s32.totalorder %s181, %s182
      %p191 = scmp.eq.s32.totalorder %s21, 0
      %p192 = por %p190, %p191
      %p193 = scmp.ne.s32.totalorder %s181, %s182
      %p194 = scmp.eq.s32.totalorder %s22, 3
      %p195 = por %p193, %p194
      %p197 = scmp.ne.s32.totalorder %s182, %s196
      %p198 = scmp.eq.s32.totalorder %s22, 0
      %p199 = por %p197, %p198
      %s200 = ssub.s32 %s23, %s35
      %s201 = ssub.s32 %s24, %s31
      %s202 = sor.u32 %s200, %s201
      %p203 = scmp.eq.s32.totalorder %s202, 0
      %s205 = sadd.s32 %s204, 1
      %s206 = scalar_select %p203, %s204, %s205
      %p209 = pneg %p203
      %p210 = scmp.eq.s32.totalorder %s16, 3
      %p211 = por %p209, %p210
      %p212 = scmp.ne.s32.totalorder %s204, %s207
      %p213 = scmp.eq.s32.totalorder %s16, 0
      %p214 = por %p212, %p213
      %p215 = scmp.ne.s32.totalorder %s204, %s207
      %p216 = scmp.eq.s32.totalorder %s21, 3
      %p217 = por %p215, %p216
      %p218 = scmp.ne.s32.totalorder %s207, %s208
      %p219 = scmp.eq.s32.totalorder %s21, 0
      %p220 = por %p218, %p219
      %p221 = scmp.ne.s32.totalorder %s207, %s208
      %p222 = scmp.eq.s32.totalorder %s22, 3
      %p223 = por %p221, %p222
      %p225 = scmp.ne.s32.totalorder %s208, %s224
      %p226 = scmp.eq.s32.totalorder %s22, 0
      %p227 = por %p225, %p226
      %p228 = scmp.le.s32.totalorder 1, %s16
      %p229 = scmp.lt.s32.totalorder %s16, 5
      %p230 = pnand %p228, %p229
      %p231 = pneg %p230
      // Predicated region
      $region9: #{tpu_custom_call.1} parent=5 // pred_check
        _
      $region10: #{tpu_custom_call.1} parent=5 // pred_check_branch
        %233 = sbr.rel (%p230) target = $region12
      $region11: #{tpu_custom_call.1} parent=5 // pred_region
        %s234 = ssub.s32 %s16, 1
        // Predicated region
        $region13: #{tpu_custom_call.1} parent=11 // pred_check
          %p235 = pneg %p103
        $region14: #{tpu_custom_call.1} parent=11 // pred_check_branch
          %237 = sbr.rel (%p235) target = $region16
        $region15: #{tpu_custom_call.1} parent=11 // pred_region
          _
        $region16: #{tpu_custom_call.1} parent=11 // pred_fallthru
          _
        // Predicated region
        $region17: #{tpu_custom_call.1} parent=11 // pred_check
          %p238 = pneg %p150
        $region18: #{tpu_custom_call.1} parent=11 // pred_check_branch
          %240 = sbr.rel (%p238) target = $region20
        $region19: #{tpu_custom_call.1} parent=11 // pred_region
          _
        $region20: #{tpu_custom_call.1} parent=11 // pred_fallthru
          _
        // Predicated region
        $region21: #{tpu_custom_call.1} parent=11 // pred_check
          %p241 = pneg %p171
        $region22: #{tpu_custom_call.1} parent=11 // pred_check_branch
          %243 = sbr.rel (%p241) target = $region24
        $region23: #{tpu_custom_call.1} parent=11 // pred_region
          _
        $region24: #{tpu_custom_call.1} parent=11 // pred_fallthru
          _
        // Predicated region
        $region25: #{tpu_custom_call.1} parent=11 // pred_check
          %p244 = pneg %p192
        $region26: #{tpu_custom_call.1} parent=11 // pred_check_branch
          %246 = sbr.rel (%p244) target = $region28
        $region27: #{tpu_custom_call.1} parent=11 // pred_region
          _
        $region28: #{tpu_custom_call.1} parent=11 // pred_fallthru
          _
      $region12: #{tpu_custom_call.1} parent=5 // pred_fallthru
        _
      %p247 = scmp.lt.s32.totalorder %s16, 4
      // Predicated region
      $region29: #{tpu_custom_call.1} parent=5 // pred_check
        %p248 = pneg %p247
      $region30: #{tpu_custom_call.1} parent=5 // pred_check_branch
        %250 = sbr.rel (%p248) target = $region32
      $region31: #{tpu_custom_call.1} parent=5 // pred_region
        // Predicated region
        $region33: #{tpu_custom_call.1} parent=31 // pred_check
          %p251 = pneg %p48
        $region34: #{tpu_custom_call.1} parent=31 // pred_check_branch
          %253 = sbr.rel (%p251) target = $region36
        $region35: #{tpu_custom_call.1} parent=31 // pred_region
          %p254 = scmp.lt.s32.totalorder %s23, 1
          %s255 = scalar_select %p254, %s23, 1
          %s256 = smul.addr %s255, 2
          %s257 = smul.addr %s256, 8
          %s258 = scalar_lea.vmem %s0, %s257
        $region36: #{tpu_custom_call.1} parent=31 // pred_fallthru
          _
        // Predicated region
        $region37: #{tpu_custom_call.1} parent=31 // pred_check
          %p259 = pneg %p76
        $region38: #{tpu_custom_call.1} parent=31 // pred_check_branch
          %261 = sbr.rel (%p259) target = $region40
        $region39: #{tpu_custom_call.1} parent=31 // pred_region
          %p262 = scmp.lt.s32.totalorder %s23, 1
          %s263 = scalar_select %p262, %s23, 1
          %p264 = scmp.lt.s32.totalorder %s24, 1
          %s265 = scalar_select %p264, %s24, 1
          %s266 = smul.addr %s263, 2
          %s267 = sadd.s32 %s265, %s266
          %s268 = smul.addr %s267, 8
          %s269 = scalar_lea.vmem %s1, %s268
        $region40: #{tpu_custom_call.1} parent=31 // pred_fallthru
          _
        // Predicated region
        $region41: #{tpu_custom_call.1} parent=31 // pred_check
          %p270 = pneg %p123
        $region42: #{tpu_custom_call.1} parent=31 // pred_check_branch
          %272 = sbr.rel (%p270) target = $region44
        $region43: #{tpu_custom_call.1} parent=31 // pred_region
          %s273 = sand.u32 %s113, 1
          %s274 = sand.u32 %s113, 1
          %s275 = smul.addr %s274, 56
          %s276 = scalar_lea.vmem [#allocation2], %s275
          %s277 = smul.addr %s24, 8
          %s278 = scalar_lea.vmem %s3, %s277
          // Predicated region
          $region45: #{tpu_custom_call.1} parent=43 // pred_check
            _
          $region46: #{tpu_custom_call.1} parent=43 // pred_check_branch
            %280 = sbr.rel (0) target = $region48
          $region47: #{tpu_custom_call.1} parent=43 // pred_region
            // Predicated region
            $region49: #{tpu_custom_call.1} parent=47 // pred_check
              _
            $region50: #{tpu_custom_call.1} parent=47 // pred_check_branch
              %282 = sbr.rel (0) target = $region52
            $region51: #{tpu_custom_call.1} parent=47 // pred_region
              // Predicated region
              $region64: #{tpu_custom_call.1} parent=51 // pred_check
                _
              $region65: #{tpu_custom_call.1} parent=51 // pred_check_branch
                %309 = sbr.rel (0) target = $region67
              $region66: #{tpu_custom_call.1} parent=51 // pred_region
                loop: start=0, step=1, limit=1
                $region68: #{tpu_custom_call.1} parent=66 // loop_pre_header
                  _
                $region69: #{tpu_custom_call.1} parent=66 // loop_header
                  %s311 = sphi 0, %s315
                  %p312 = scmp.ge.s32.totalorder %s311, 1
                  %s316 = sphi %s278, %s278
                  %s317 = sphi %s276, %s276
                $region70: #{tpu_custom_call.1} parent=66 // loop_header_branch
                  %314 = sbr.rel (%p312) target = $region74
                $region71: #{tpu_custom_call.1} parent=66 // loop_body
                  %v318 = vld [vmem:[%s316] sm:$0xff]
                  %319 = vst [vmem:[%s317] sm:$0xff] %v318
                  %v320 = vld [vmem:[%s316 + $0x10] sm:$0xff]
                  %321 = vst [vmem:[%s317 + $0x8] sm:$0xff] %v320
                  %v322 = vld [vmem:[%s316 + $0x20] sm:$0xff]
                  %323 = vst [vmem:[%s317 + $0x10] sm:$0xff] %v322
                  %v324 = vld [vmem:[%s316 + $0x30] sm:$0xff]
                  %325 = vst [vmem:[%s317 + $0x18] sm:$0xff] %v324
                  %v326 = vld [vmem:[%s316 + $0x40] sm:$0xff]
                  %327 = vst [vmem:[%s317 + $0x20] sm:$0xff] %v326
                  %v328 = vld [vmem:[%s316 + $0x50] sm:$0xff]
                  %329 = vst [vmem:[%s317 + $0x28] sm:$0xff] %v328
                  %v330 = vld [vmem:[%s316 + $0x60] sm:$0xff]
                  %331 = vst [vmem:[%s317 + $0x30] sm:$0xff] %v330
                $region72: #{tpu_custom_call.1} parent=66 // loop_footer
                  %s315 = sadd.s32 1, %s311
                $region73: #{tpu_custom_call.1} parent=66 // loop_footer_branch
                  %310 = sbr.rel target = $region69
                $region74: #{tpu_custom_call.1} parent=66 // loop_exit
                  _
              $region67: #{tpu_custom_call.1} parent=51 // pred_fallthru
                _
              // Predicated region
              $region75: #{tpu_custom_call.1} parent=51 // pred_check
                _
              $region76: #{tpu_custom_call.1} parent=51 // pred_check_branch
                %333 = sbr.rel target = $region78
              $region77: #{tpu_custom_call.1} parent=51 // pred_region
                _
              $region78: #{tpu_custom_call.1} parent=51 // pred_fallthru
                _
            $region52: #{tpu_custom_call.1} parent=47 // pred_fallthru
              _
            // Predicated region
            $region53: #{tpu_custom_call.1} parent=47 // pred_check
              _
            $region54: #{tpu_custom_call.1} parent=47 // pred_check_branch
              %284 = sbr.rel target = $region56
            $region55: #{tpu_custom_call.1} parent=47 // pred_region
              loop: start=0, step=1, limit=1
              $region57: #{tpu_custom_call.1} parent=55 // loop_pre_header
                _
              $region58: #{tpu_custom_call.1} parent=55 // loop_header
                %s287 = sphi 0, %s291
                %p288 = scmp.ge.s32.totalorder %s287, 1
                %s292 = sphi %s278, %s278
                %s293 = sphi %s276, %s276
              $region59: #{tpu_custom_call.1} parent=55 // loop_header_branch
                %290 = sbr.rel (%p288) target = $region63
              $region60: #{tpu_custom_call.1} parent=55 // loop_body
                %v294 = vld [vmem:[%s292] sm:$0xff]
                %295 = vst [vmem:[%s293] sm:$0xff] %v294
                %v296 = vld [vmem:[%s292 + $0x10] sm:$0xff]
                %297 = vst [vmem:[%s293 + $0x8] sm:$0xff] %v296
                %v298 = vld [vmem:[%s292 + $0x20] sm:$0xff]
                %299 = vst [vmem:[%s293 + $0x10] sm:$0xff] %v298
                %v300 = vld [vmem:[%s292 + $0x30] sm:$0xff]
                %301 = vst [vmem:[%s293 + $0x18] sm:$0xff] %v300
                %v302 = vld [vmem:[%s292 + $0x40] sm:$0xff]
                %303 = vst [vmem:[%s293 + $0x20] sm:$0xff] %v302
                %v304 = vld [vmem:[%s292 + $0x50] sm:$0xff]
                %305 = vst [vmem:[%s293 + $0x28] sm:$0xff] %v304
                %v306 = vld [vmem:[%s292 + $0x60] sm:$0xff]
                %307 = vst [vmem:[%s293 + $0x30] sm:$0xff] %v306
              $region61: #{tpu_custom_call.1} parent=55 // loop_footer
                %s291 = sadd.s32 1, %s287
              $region62: #{tpu_custom_call.1} parent=55 // loop_footer_branch
                %286 = sbr.rel target = $region58
              $region63: #{tpu_custom_call.1} parent=55 // loop_exit
                _
            $region56: #{tpu_custom_call.1} parent=47 // pred_fallthru
              _
          $region48: #{tpu_custom_call.1} parent=43 // pred_fallthru
            _
          %334 = vnop
        $region44: #{tpu_custom_call.1} parent=31 // pred_fallthru
          _
      $region32: #{tpu_custom_call.1} parent=5 // pred_fallthru
        _
      %p335 = scmp.le.s32.totalorder 1, %s16
      %p336 = scmp.lt.s32.totalorder %s16, 5
      %p337 = pnand %p335, %p336
      %p338 = pneg %p337
      // Predicated region
      $region79: #{tpu_custom_call.1} parent=5 // pred_check
        _
      $region80: #{tpu_custom_call.1} parent=5 // pred_check_branch
        %340 = sbr.rel (%p337) target = $region82
      $region81: #{tpu_custom_call.1} parent=5 // pred_region
        %s341 = ssub.s32 %s16, 1
        %s342 = sand.u32 %s116, 1
        %s343 = sand.u32 %s116, 1
        %s344 = smul.addr %s343, 56
        %s345 = scalar_lea.vmem [#allocation2], %s344
        // Predicated region
        $region83: #{tpu_custom_call.1} parent=81 // pred_check
          %p346 = pneg %p129
        $region84: #{tpu_custom_call.1} parent=81 // pred_check_branch
          %348 = sbr.rel (%p346) target = $region86
        $region85: #{tpu_custom_call.1} parent=81 // pred_region
          _
        $region86: #{tpu_custom_call.1} parent=81 // pred_fallthru
          _
        %p349 = scmp.lt.s32.totalorder %s25, 1
        %s350 = scalar_select %p349, %s25, 1
        %s351 = smul.addr %s350, 2
        %s352 = smul.addr %s351, 8
        %s353 = scalar_lea.vmem %s0, %s352
        %p354 = pneg %p54
        %p355 = pneg %p51
        %p356 = scmp.lt.s32.totalorder %s25, 1
        %s357 = scalar_select %p356, %s25, 1
        %p358 = scmp.lt.s32.totalorder %s26, 1
        %s359 = scalar_select %p358, %s26, 1
        %s360 = smul.addr %s357, 2
        %s361 = sadd.s32 %s359, %s360
        %s362 = smul.addr %s361, 8
        %s363 = scalar_lea.vmem %s1, %s362
        %p364 = pneg %p82
        %p365 = pneg %p79
        %p366 = pneg %p103
        %p367 = pneg %p100
        %s368 = sand.u32 %s116, 1
        %s369 = sand.u32 %s116, 1
        %s370 = smul.addr %s369, 56
        %s371 = scalar_lea.vmem [#allocation2], %s370
        %p372 = pneg %p129
        %p373 = pneg %p126
        %p374 = pneg %p150
        %p375 = pneg %p147
        %p376 = pneg %p171
        %p377 = pneg %p168
        %p378 = pneg %p192
        %p379 = pneg %p189
        %p380 = pneg %p220
        %p381 = pneg %p217
        %s382 = sand.u32 %s207, 1
        %s383 = scalar_lea.sflag [#allocation4], %s382
        %s384 = sand.u32 %s207, 1
        %s385 = smul.addr %s384, 32
        %s386 = scalar_lea.vmem [#allocation3], %s385
        %p387 = scmp.lt.s32.totalorder %s25, 1
        %s388 = scalar_select %p387, %s25, 1
        %s389 = smul.addr %s388, 2
        %s390 = smul.addr %s389, 8
        %s391 = scalar_lea.vmem %s0, %s390
        %p392 = scmp.lt.s32.totalorder %s25, 1
        %s393 = scalar_select %p392, %s25, 1
        %p394 = scmp.lt.s32.totalorder %s26, 1
        %s395 = scalar_select %p394, %s26, 1
        %s396 = smul.addr %s393, 2
        %s397 = sadd.s32 %s395, %s396
        %s398 = smul.addr %s397, 8
        %s399 = scalar_lea.vmem %s1, %s398
        %v400 = vld [vmem:[%s391] sm:$0xff]
        %v401 = vld [vmem:[%s391 + $0x8] sm:$0xff]
        %v402 = vld [vmem:[%s399] sm:$0xff]
        %v403 = vld [vmem:[%s5] sm:$0xff]
        %v404 = vld [vmem:[%s5 + $0x8] sm:$0xff]
        %v405 = vld [vmem:[%s5 + $0x10] sm:$0xff]
        %v406 = vld [vmem:[%s5 + $0x18] sm:$0xff]
        %v407 = vld [vmem:[%s2] sm:$0xff]
        %v408 = vld [vmem:[%s2 + $0x8] sm:$0xff]
        %v409 = vld [vmem:[%s2 + $0x10] sm:$0xff]
        %v410 = vld [vmem:[%s2 + $0x18] sm:$0xff]
        %v411 = vld [vmem:[%s2 + $0x20] sm:$0xff]
        %v412 = vld [vmem:[%s2 + $0x28] sm:$0xff]
        %v413 = vld [vmem:[%s2 + $0x30] sm:$0xff]
        %v414 = vld [vmem:[%s2 + $0x38] sm:$0xff]
        %v415 = vld [vmem:[%s2 + $0x40] sm:$0xff]
        %v416 = vld [vmem:[%s2 + $0x48] sm:$0xff]
        %v417 = vld [vmem:[%s2 + $0x50] sm:$0xff]
        %v418 = vld [vmem:[%s2 + $0x58] sm:$0xff]
        %v419 = vld [vmem:[%s2 + $0x60] sm:$0xff]
        %v420 = vld [vmem:[%s2 + $0x68] sm:$0xff]
        %v421 = vld [vmem:[%s2 + $0x70] sm:$0xff]
        %v422 = vld [vmem:[%s2 + $0x78] sm:$0xff]
        %v423 = vld [vmem:[%s2 + $0x80] sm:$0xff]
        %v424 = vld [vmem:[%s2 + $0x88] sm:$0xff]
        %v425 = vld [vmem:[%s2 + $0x90] sm:$0xff]
        %v426 = vld [vmem:[%s2 + $0x98] sm:$0xff]
        %v427 = vld [vmem:[%s2 + $0xa0] sm:$0xff]
        %v428 = vld [vmem:[%s2 + $0xa8] sm:$0xff]
        %v429 = vld [vmem:[%s2 + $0xb0] sm:$0xff]
        %v430 = vld [vmem:[%s2 + $0xb8] sm:$0xff]
        %v431 = vld [vmem:[%s2 + $0xc0] sm:$0xff]
        %v432 = vld [vmem:[%s2 + $0xc8] sm:$0xff]
        %v433 = vld [vmem:[%s2 + $0xd0] sm:$0xff]
        %v434 = vld [vmem:[%s2 + $0xd8] sm:$0xff]
        %v435 = vld [vmem:[%s2 + $0xe0] sm:$0xff]
        %v436 = vld [vmem:[%s2 + $0xe8] sm:$0xff]
        %v437 = vld [vmem:[%s2 + $0xf0] sm:$0xff]
        %v438 = vld [vmem:[%s2 + $0xf8] sm:$0xff]
        %439 = vmatprep.subr.mxu0 0.0
        %440 = vmatpush1.msra.mxu0 %v407
        %441 = vmatprep.subr.mxu0 0.0
        %442 = vmatpush1.msra.mxu0 %v408
        %443 = vmatprep.subr.mxu0 0.0
        %444 = vmatpush1.msra.mxu0 %v409
        %445 = vmatprep.subr.mxu0 0.0
        %446 = vmatpush1.msra.mxu0 %v410
        %447 = vmatprep.subr.mxu0 0.0
        %448 = vmatpush1.msra.mxu0 %v411
        %449 = vmatprep.subr.mxu0 0.0
        %450 = vmatpush1.msra.mxu0 %v412
        %451 = vmatprep.subr.mxu0 0.0
        %452 = vmatpush1.msra.mxu0 %v413
        %453 = vmatprep.subr.mxu0 0.0
        %454 = vmatpush1.msra.mxu0 %v414
        %455 = vmatprep.subr.mxu0 0.0
        %456 = vmatpush1.msra.mxu0 %v415
        %457 = vmatprep.subr.mxu0 0.0
        %458 = vmatpush1.msra.mxu0 %v416
        %459 = vmatprep.subr.mxu0 0.0
        %460 = vmatpush1.msra.mxu0 %v417
        %461 = vmatprep.subr.mxu0 0.0
        %462 = vmatpush1.msra.mxu0 %v418
        %463 = vmatprep.subr.mxu0 0.0
        %464 = vmatpush1.msra.mxu0 %v419
        %465 = vmatprep.subr.mxu0 0.0
        %466 = vmatpush1.msra.mxu0 %v420
        %467 = vmatprep.subr.mxu0 0.0
        %468 = vmatpush1.msra.mxu0 %v421
        %469 = vmatprep.subr.mxu0 0.0
        %470 = vmatpush1.msra.mxu0 %v422
        %471 = vmatprep.subr.mxu0 0.0
        %472 = vmatpush1.msra.mxu0 %v423
        %473 = vmatprep.subr.mxu0 0.0
        %474 = vmatpush1.msra.mxu0 %v424
        %475 = vmatprep.subr.mxu0 0.0
        %476 = vmatpush1.msra.mxu0 %v425
        %477 = vmatprep.subr.mxu0 0.0
        %478 = vmatpush1.msra.mxu0 %v426
        %479 = vmatprep.subr.mxu0 0.0
        %480 = vmatpush1.msra.mxu0 %v427
        %481 = vmatprep.subr.mxu0 0.0
        %482 = vmatpush1.msra.mxu0 %v428
        %483 = vmatprep.subr.mxu0 0.0
        %484 = vmatpush1.msra.mxu0 %v429
        %485 = vmatprep.subr.mxu0 0.0
        %486 = vmatpush1.msra.mxu0 %v430
        %487 = vmatprep.subr.mxu0 0.0
        %488 = vmatpush1.msra.mxu0 %v431
        %489 = vmatprep.subr.mxu0 0.0
        %490 = vmatpush1.msra.mxu0 %v432
        %491 = vmatprep.subr.mxu0 0.0
        %492 = vmatpush1.msra.mxu0 %v433
        %493 = vmatprep.subr.mxu0 0.0
        %494 = vmatpush1.msra.mxu0 %v434
        %495 = vmatprep.subr.mxu0 0.0
        %496 = vmatpush1.msra.mxu0 %v435
        %497 = vmatprep.subr.mxu0 0.0
        %498 = vmatpush1.msra.mxu0 %v436
        %499 = vmatprep.subr.mxu0 0.0
        %500 = vmatpush1.msra.mxu0 %v437
        %501 = vmatprep.subr.mxu0 0.0
        %502 = vmatpush1.msra.mxu0 %v438
        %503 = vmatprep.mubr.f32.mxu0 %v401
        %504 = vmatmul.mubr.f32.gmra.mrb[0].mxu0 %v400
        %v505 = vpop.f32.mrb[0].mxu0
        %v506 = vadd.f32 0.0, %v505
        %v507 = vpop.f32.mrb[0].mxu0
        %508 = vdwg.mxu0
        %v509 = vld [vmem:[%s4] sm:$0xff]
        %v510 = vld [vmem:[%s4 + $0x8] sm:$0xff]
        %v511 = vld [vmem:[%s4 + $0x10] sm:$0xff]
        %v512 = vld [vmem:[%s4 + $0x18] sm:$0xff]
        %vm513 = vcmask 64512
        %v515 = vsel %vm513, %v509, 0
        %v518 = vsel %vm513, %v510, 0
        %v521 = vsel %vm513, %v511, 0
        %v524 = vsel %vm513, %v512, 0
        %526 = vmatprep.subr.mxu0 0.0
        %527 = vmatpush1.msra.mxu0 %v506
        %528 = vmatprep.subr.mxu0 0.0
        %529 = vmatpush1.msra.mxu0 0.0
        %530 = vmatprep.subr.mxu0 0.0
        %531 = vmatpush1.msra.mxu0 0.0
        %532 = vmatprep.subr.mxu0 0.0
        %533 = vmatpush1.msra.mxu0 0.0
        %534 = vmatprep.subr.mxu0 0.0
        %535 = vmatpush1.msra.mxu0 0.0
        %536 = vmatprep.subr.mxu0 0.0
        %537 = vmatpush1.msra.mxu0 0.0
        %538 = vmatprep.subr.mxu0 0.0
        %539 = vmatpush1.msra.mxu0 0.0
        %540 = vmatprep.subr.mxu0 0.0
        %541 = vmatpush1.msra.mxu0 0.0
        %542 = vmatprep.subr.mxu0 0.0
        %543 = vmatpush1.msra.mxu0 0.0
        %544 = vmatprep.subr.mxu0 0.0
        %545 = vmatpush1.msra.mxu0 0.0
        %546 = vmatprep.subr.mxu0 0.0
        %547 = vmatpush1.msra.mxu0 0.0
        %548 = vmatprep.subr.mxu0 0.0
        %549 = vmatpush1.msra.mxu0 0.0
        %550 = vmatprep.subr.mxu0 0.0
        %551 = vmatpush1.msra.mxu0 0.0
        %552 = vmatprep.subr.mxu0 0.0
        %553 = vmatpush1.msra.mxu0 0.0
        %554 = vmatprep.subr.mxu0 0.0
        %555 = vmatpush1.msra.mxu0 0.0
        %556 = vmatprep.subr.mxu0 0.0
        %557 = vmatpush1.msra.mxu0 0.0
        %558 = vmatprep.subr.mxu0 0.0
        %559 = vmatpush1.msra.mxu0 0.0
        %560 = vmatprep.subr.mxu0 0.0
        %561 = vmatpush1.msra.mxu0 0.0
        %562 = vmatprep.subr.mxu0 0.0
        %563 = vmatpush1.msra.mxu0 0.0
        %564 = vmatprep.subr.mxu0 0.0
        %565 = vmatpush1.msra.mxu0 0.0
        %566 = vmatprep.subr.mxu0 0.0
        %567 = vmatpush1.msra.mxu0 0.0
        %568 = vmatprep.subr.mxu0 0.0
        %569 = vmatpush1.msra.mxu0 0.0
        %570 = vmatprep.subr.mxu0 0.0
        %571 = vmatpush1.msra.mxu0 0.0
        %572 = vmatprep.subr.mxu0 0.0
        %573 = vmatpush1.msra.mxu0 0.0
        %574 = vmatprep.subr.mxu0 0.0
        %575 = vmatpush1.msra.mxu0 0.0
        %576 = vmatprep.subr.mxu0 0.0
        %577 = vmatpush1.msra.mxu0 0.0
        %578 = vmatprep.subr.mxu0 0.0
        %579 = vmatpush1.msra.mxu0 0.0
        %580 = vmatprep.subr.mxu0 0.0
        %581 = vmatpush1.msra.mxu0 0.0
        %582 = vmatprep.subr.mxu0 0.0
        %583 = vmatpush1.msra.mxu0 0.0
        %584 = vmatprep.subr.mxu0 0.0
        %585 = vmatpush1.msra.mxu0 0.0
        %586 = vmatprep.subr.mxu0 0.0
        %587 = vmatpush1.msra.mxu0 0.0
        %588 = vmatprep.subr.mxu0 0.0
        %589 = vmatpush1.msra.mxu0 0.0
        %590 = vmatprep.mubr.f32.mxu0 0.0
        %591 = vmatmul.mubr.f32.gmra.mrb[0].mxu0 %v515
        %v592 = vpop.f32.mrb[0].mxu0
        %v593 = vadd.f32 0.0, %v592
        %v594 = vpop.f32.mrb[0].mxu0
        %595 = vmatprep.mubr.f32.mxu0 0.0
        %596 = vmatmul.mubr.f32.gmra.mrb[0].mxu0 %v518
        %v597 = vpop.f32.mrb[0].mxu0
        %v598 = vadd.f32 0.0, %v597
        %v599 = vpop.f32.mrb[0].mxu0
        %600 = vmatprep.mubr.f32.mxu0 0.0
        %601 = vmatmul.mubr.f32.gmra.mrb[0].mxu0 %v521
        %v602 = vpop.f32.mrb[0].mxu0
        %v603 = vadd.f32 0.0, %v602
        %v604 = vpop.f32.mrb[0].mxu0
        %605 = vmatprep.mubr.f32.mxu0 0.0
        %606 = vmatmul.mubr.f32.gmra.mrb[0].mxu0 %v524
        %v607 = vpop.f32.mrb[0].mxu0
        %v608 = vadd.f32 0.0, %v607
        %v609 = vpop.f32.mrb[0].mxu0
        %610 = vdwg.mxu0
        %s611 = scalar_lea.vmem %s4, 32
        %v612 = vld [vmem:[%s611] sm:$0xff]
        %v613 = vld [vmem:[%s611 + $0x8] sm:$0xff]
        %v614 = vld [vmem:[%s611 + $0x10] sm:$0xff]
        %v615 = vld [vmem:[%s611 + $0x18] sm:$0xff]
        %617 = vrot.lane.b32.xlu0 %v506, 127
        %v618 = vpop.permute.xlu0 %617
        %v621 = vsel %vm513, %v612, 0
        %v624 = vsel %vm513, %v613, 0
        %v627 = vsel %vm513, %v614, 0
        %v630 = vsel %vm513, %v615, 0
        %632 = vmatprep.subr.mxu0 0.0
        %633 = vmatpush1.msra.mxu0 %v618
        %634 = vmatprep.subr.mxu0 0.0
        %635 = vmatpush1.msra.mxu0 0.0
        %636 = vmatprep.subr.mxu0 0.0
        %637 = vmatpush1.msra.mxu0 0.0
        %638 = vmatprep.subr.mxu0 0.0
        %639 = vmatpush1.msra.mxu0 0.0
        %640 = vmatprep.subr.mxu0 0.0
        %641 = vmatpush1.msra.mxu0 0.0
        %642 = vmatprep.subr.mxu0 0.0
        %643 = vmatpush1.msra.mxu0 0.0
        %644 = vmatprep.subr.mxu0 0.0
        %645 = vmatpush1.msra.mxu0 0.0
        %646 = vmatprep.subr.mxu0 0.0
        %647 = vmatpush1.msra.mxu0 0.0
        %648 = vmatprep.subr.mxu0 0.0
        %649 = vmatpush1.msra.mxu0 0.0
        %650 = vmatprep.subr.mxu0 0.0
        %651 = vmatpush1.msra.mxu0 0.0
        %652 = vmatprep.subr.mxu0 0.0
        %653 = vmatpush1.msra.mxu0 0.0
        %654 = vmatprep.subr.mxu0 0.0
        %655 = vmatpush1.msra.mxu0 0.0
        %656 = vmatprep.subr.mxu0 0.0
        %657 = vmatpush1.msra.mxu0 0.0
        %658 = vmatprep.subr.mxu0 0.0
        %659 = vmatpush1.msra.mxu0 0.0
        %660 = vmatprep.subr.mxu0 0.0
        %661 = vmatpush1.msra.mxu0 0.0
        %662 = vmatprep.subr.mxu0 0.0
        %663 = vmatpush1.msra.mxu0 0.0
        %664 = vmatprep.subr.mxu0 0.0
        %665 = vmatpush1.msra.mxu0 0.0
        %666 = vmatprep.subr.mxu0 0.0
        %667 = vmatpush1.msra.mxu0 0.0
        %668 = vmatprep.subr.mxu0 0.0
        %669 = vmatpush1.msra.mxu0 0.0
        %670 = vmatprep.subr.mxu0 0.0
        %671 = vmatpush1.msra.mxu0 0.0
        %672 = vmatprep.subr.mxu0 0.0
        %673 = vmatpush1.msra.mxu0 0.0
        %674 = vmatprep.subr.mxu0 0.0
        %675 = vmatpush1.msra.mxu0 0.0
        %676 = vmatprep.subr.mxu0 0.0
        %677 = vmatpush1.msra.mxu0 0.0
        %678 = vmatprep.subr.mxu0 0.0
        %679 = vmatpush1.msra.mxu0 0.0
        %680 = vmatprep.subr.mxu0 0.0
        %681 = vmatpush1.msra.mxu0 0.0
        %682 = vmatprep.subr.mxu0 0.0
        %683 = vmatpush1.msra.mxu0 0.0
        %684 = vmatprep.subr.mxu0 0.0
        %685 = vmatpush1.msra.mxu0 0.0
        %686 = vmatprep.subr.mxu0 0.0
        %687 = vmatpush1.msra.mxu0 0.0
        %688 = vmatprep.subr.mxu0 0.0
        %689 = vmatpush1.msra.mxu0 0.0
        %690 = vmatprep.subr.mxu0 0.0
        %691 = vmatpush1.msra.mxu0 0.0
        %692 = vmatprep.subr.mxu0 0.0
        %693 = vmatpush1.msra.mxu0 0.0
        %694 = vmatprep.subr.mxu0 0.0
        %695 = vmatpush1.msra.mxu0 0.0
        %696 = vmatprep.mubr.f32.mxu0 0.0
        %697 = vmatmul.mubr.f32.gmra.mrb[0].mxu0 %v621
        %v698 = vpop.f32.mrb[0].mxu0
        %v699 = vadd.f32 0.0, %v698
        %v700 = vpop.f32.mrb[0].mxu0
        %701 = vmatprep.mubr.f32.mxu0 0.0
        %702 = vmatmul.mubr.f32.gmra.mrb[0].mxu0 %v624
        %v703 = vpop.f32.mrb[0].mxu0
        %v704 = vadd.f32 0.0, %v703
        %v705 = vpop.f32.mrb[0].mxu0
        %706 = vmatprep.mubr.f32.mxu0 0.0
        %707 = vmatmul.mubr.f32.gmra.mrb[0].mxu0 %v627
        %v708 = vpop.f32.mrb[0].mxu0
        %v709 = vadd.f32 0.0, %v708
        %v710 = vpop.f32.mrb[0].mxu0
        %711 = vmatprep.mubr.f32.mxu0 0.0
        %712 = vmatmul.mubr.f32.gmra.mrb[0].mxu0 %v630
        %v713 = vpop.f32.mrb[0].mxu0
        %v714 = vadd.f32 0.0, %v713
        %v715 = vpop.f32.mrb[0].mxu0
        %716 = vdwg.mxu0
        %s717 = scalar_lea.vmem %s4, 64
        %v718 = vld [vmem:[%s717] sm:$0xff]
        %v719 = vld [vmem:[%s717 + $0x8] sm:$0xff]
        %v720 = vld [vmem:[%s717 + $0x10] sm:$0xff]
        %v721 = vld [vmem:[%s717 + $0x18] sm:$0xff]
        %722 = vrot.lane.b32.xlu0 %v506, 123
        %v723 = vpop.permute.xlu0 %722
        %v726 = vsel %vm513, %v718, 0
        %v729 = vsel %vm513, %v719, 0
        %v732 = vsel %vm513, %v720, 0
        %v735 = vsel %vm513, %v721, 0
        %737 = vmatprep.subr.mxu0 0.0
        %738 = vmatpush1.msra.mxu0 %v723
        %739 = vmatprep.subr.mxu0 0.0
        %740 = vmatpush1.msra.mxu0 0.0
        %741 = vmatprep.subr.mxu0 0.0
        %742 = vmatpush1.msra.mxu0 0.0
        %743 = vmatprep.subr.mxu0 0.0
        %744 = vmatpush1.msra.mxu0 0.0
        %745 = vmatprep.subr.mxu0 0.0
        %746 = vmatpush1.msra.mxu0 0.0
        %747 = vmatprep.subr.mxu0 0.0
        %748 = vmatpush1.msra.mxu0 0.0
        %749 = vmatprep.subr.mxu0 0.0
        %750 = vmatpush1.msra.mxu0 0.0
        %751 = vmatprep.subr.mxu0 0.0
        %752 = vmatpush1.msra.mxu0 0.0
        %753 = vmatprep.subr.mxu0 0.0
        %754 = vmatpush1.msra.mxu0 0.0
        %755 = vmatprep.subr.mxu0 0.0
        %756 = vmatpush1.msra.mxu0 0.0
        %757 = vmatprep.subr.mxu0 0.0
        %758 = vmatpush1.msra.mxu0 0.0
        %759 = vmatprep.subr.mxu0 0.0
        %760 = vmatpush1.msra.mxu0 0.0
        %761 = vmatprep.subr.mxu0 0.0
        %762 = vmatpush1.msra.mxu0 0.0
        %763 = vmatprep.subr.mxu0 0.0
        %764 = vmatpush1.msra.mxu0 0.0
        %765 = vmatprep.subr.mxu0 0.0
        %766 = vmatpush1.msra.mxu0 0.0
        %767 = vmatprep.subr.mxu0 0.0
        %768 = vmatpush1.msra.mxu0 0.0
        %769 = vmatprep.subr.mxu0 0.0
        %770 = vmatpush1.msra.mxu0 0.0
        %771 = vmatprep.subr.mxu0 0.0
        %772 = vmatpush1.msra.mxu0 0.0
        %773 = vmatprep.subr.mxu0 0.0
        %774 = vmatpush1.msra.mxu0 0.0
        %775 = vmatprep.subr.mxu0 0.0
        %776 = vmatpush1.msra.mxu0 0.0
        %777 = vmatprep.subr.mxu0 0.0
        %778 = vmatpush1.msra.mxu0 0.0
        %779 = vmatprep.subr.mxu0 0.0
        %780 = vmatpush1.msra.mxu0 0.0
        %781 = vmatprep.subr.mxu0 0.0
        %782 = vmatpush1.msra.mxu0 0.0
        %783 = vmatprep.subr.mxu0 0.0
        %784 = vmatpush1.msra.mxu0 0.0
        %785 = vmatprep.subr.mxu0 0.0
        %786 = vmatpush1.msra.mxu0 0.0
        %787 = vmatprep.subr.mxu0 0.0
        %788 = vmatpush1.msra.mxu0 0.0
        %789 = vmatprep.subr.mxu0 0.0
        %790 = vmatpush1.msra.mxu0 0.0
        %791 = vmatprep.subr.mxu0 0.0
        %792 = vmatpush1.msra.mxu0 0.0
        %793 = vmatprep.subr.mxu0 0.0
        %794 = vmatpush1.msra.mxu0 0.0
        %795 = vmatprep.subr.mxu0 0.0
        %796 = vmatpush1.msra.mxu0 0.0
        %797 = vmatprep.subr.mxu0 0.0
        %798 = vmatpush1.msra.mxu0 0.0
        %799 = vmatprep.subr.mxu0 0.0
        %800 = vmatpush1.msra.mxu0 0.0
        %801 = vmatprep.mubr.f32.mxu0 0.0
        %802 = vmatmul.mubr.f32.gmra.mrb[0].mxu0 %v726
        %v803 = vpop.f32.mrb[0].mxu0
        %v804 = vadd.f32 0.0, %v803
        %v805 = vpop.f32.mrb[0].mxu0
        %806 = vmatprep.mubr.f32.mxu0 0.0
        %807 = vmatmul.mubr.f32.gmra.mrb[0].mxu0 %v729
        %v808 = vpop.f32.mrb[0].mxu0
        %v809 = vadd.f32 0.0, %v808
        %v810 = vpop.f32.mrb[0].mxu0
        %811 = vmatprep.mubr.f32.mxu0 0.0
        %812 = vmatmul.mubr.f32.gmra.mrb[0].mxu0 %v732
        %v813 = vpop.f32.mrb[0].mxu0
        %v814 = vadd.f32 0.0, %v813
        %v815 = vpop.f32.mrb[0].mxu0
        %816 = vmatprep.mubr.f32.mxu0 0.0
        %817 = vmatmul.mubr.f32.gmra.mrb[0].mxu0 %v735
        %v818 = vpop.f32.mrb[0].mxu0
        %v819 = vadd.f32 0.0, %v818
        %v820 = vpop.f32.mrb[0].mxu0
        %821 = vdwg.mxu0
        %s822 = scalar_lea.vmem %s4, 96
        %v823 = vld [vmem:[%s822] sm:$0xff]
        %v824 = vld [vmem:[%s822 + $0x8] sm:$0xff]
        %v825 = vld [vmem:[%s822 + $0x10] sm:$0xff]
        %v826 = vld [vmem:[%s822 + $0x18] sm:$0xff]
        %827 = vrot.lane.b32.xlu0 %v506, 114
        %v828 = vpop.permute.xlu0 %827
        %v831 = vsel %vm513, %v823, 0
        %v834 = vsel %vm513, %v824, 0
        %v837 = vsel %vm513, %v825, 0
        %v840 = vsel %vm513, %v826, 0
        %842 = vmatprep.subr.mxu0 0.0
        %843 = vmatpush1.msra.mxu0 %v828
        %844 = vmatprep.subr.mxu0 0.0
        %845 = vmatpush1.msra.mxu0 0.0
        %846 = vmatprep.subr.mxu0 0.0
        %847 = vmatpush1.msra.mxu0 0.0
        %848 = vmatprep.subr.mxu0 0.0
        %849 = vmatpush1.msra.mxu0 0.0
        %850 = vmatprep.subr.mxu0 0.0
        %851 = vmatpush1.msra.mxu0 0.0
        %852 = vmatprep.subr.mxu0 0.0
        %853 = vmatpush1.msra.mxu0 0.0
        %854 = vmatprep.subr.mxu0 0.0
        %855 = vmatpush1.msra.mxu0 0.0
        %856 = vmatprep.subr.mxu0 0.0
        %857 = vmatpush1.msra.mxu0 0.0
        %858 = vmatprep.subr.mxu0 0.0
        %859 = vmatpush1.msra.mxu0 0.0
        %860 = vmatprep.subr.mxu0 0.0
        %861 = vmatpush1.msra.mxu0 0.0
        %862 = vmatprep.subr.mxu0 0.0
        %863 = vmatpush1.msra.mxu0 0.0
        %864 = vmatprep.subr.mxu0 0.0
        %865 = vmatpush1.msra.mxu0 0.0
        %866 = vmatprep.subr.mxu0 0.0
        %867 = vmatpush1.msra.mxu0 0.0
        %868 = vmatprep.subr.mxu0 0.0
        %869 = vmatpush1.msra.mxu0 0.0
        %870 = vmatprep.subr.mxu0 0.0
        %871 = vmatpush1.msra.mxu0 0.0
        %872 = vmatprep.subr.mxu0 0.0
        %873 = vmatpush1.msra.mxu0 0.0
        %874 = vmatprep.subr.mxu0 0.0
        %875 = vmatpush1.msra.mxu0 0.0
        %876 = vmatprep.subr.mxu0 0.0
        %877 = vmatpush1.msra.mxu0 0.0
        %878 = vmatprep.subr.mxu0 0.0
        %879 = vmatpush1.msra.mxu0 0.0
        %880 = vmatprep.subr.mxu0 0.0
        %881 = vmatpush1.msra.mxu0 0.0
        %882 = vmatprep.subr.mxu0 0.0
        %883 = vmatpush1.msra.mxu0 0.0
        %884 = vmatprep.subr.mxu0 0.0
        %885 = vmatpush1.msra.mxu0 0.0
        %886 = vmatprep.subr.mxu0 0.0
        %887 = vmatpush1.msra.mxu0 0.0
        %888 = vmatprep.subr.mxu0 0.0
        %889 = vmatpush1.msra.mxu0 0.0
        %890 = vmatprep.subr.mxu0 0.0
        %891 = vmatpush1.msra.mxu0 0.0
        %892 = vmatprep.subr.mxu0 0.0
        %893 = vmatpush1.msra.mxu0 0.0
        %894 = vmatprep.subr.mxu0 0.0
        %895 = vmatpush1.msra.mxu0 0.0
        %896 = vmatprep.subr.mxu0 0.0
        %897 = vmatpush1.msra.mxu0 0.0
        %898 = vmatprep.subr.mxu0 0.0
        %899 = vmatpush1.msra.mxu0 0.0
        %900 = vmatprep.subr.mxu0 0.0
        %901 = vmatpush1.msra.mxu0 0.0
        %902 = vmatprep.subr.mxu0 0.0
        %903 = vmatpush1.msra.mxu0 0.0
        %904 = vmatprep.subr.mxu0 0.0
        %905 = vmatpush1.msra.mxu0 0.0
        %906 = vmatprep.mubr.f32.mxu0 0.0
        %907 = vmatmul.mubr.f32.gmra.mrb[0].mxu0 %v831
        %v908 = vpop.f32.mrb[0].mxu0
        %v909 = vadd.f32 0.0, %v908
        %v910 = vpop.f32.mrb[0].mxu0
        %911 = vmatprep.mubr.f32.mxu0 0.0
        %912 = vmatmul.mubr.f32.gmra.mrb[0].mxu0 %v834
        %v913 = vpop.f32.mrb[0].mxu0
        %v914 = vadd.f32 0.0, %v913
        %v915 = vpop.f32.mrb[0].mxu0
        %916 = vmatprep.mubr.f32.mxu0 0.0
        %917 = vmatmul.mubr.f32.gmra.mrb[0].mxu0 %v837
        %v918 = vpop.f32.mrb[0].mxu0
        %v919 = vadd.f32 0.0, %v918
        %v920 = vpop.f32.mrb[0].mxu0
        %921 = vmatprep.mubr.f32.mxu0 0.0
        %922 = vmatmul.mubr.f32.gmra.mrb[0].mxu0 %v840
        %v923 = vpop.f32.mrb[0].mxu0
        %v924 = vadd.f32 0.0, %v923
        %v925 = vpop.f32.mrb[0].mxu0
        %926 = vdwg.mxu0
        %931 = vrot.lane.b32.xlu0 %v699, 1
        %v932 = vpop.permute.xlu0 %931
        %933 = vrot.lane.b32.xlu0 %v704, 1
        %v934 = vpop.permute.xlu0 %933
        %935 = vrot.lane.b32.xlu0 %v709, 1
        %v936 = vpop.permute.xlu0 %935
        %937 = vrot.lane.b32.xlu0 %v714, 1
        %v938 = vpop.permute.xlu0 %937
        %947 = vrot.lane.b32.xlu0 %v804, 5
        %v948 = vpop.permute.xlu0 %947
        %949 = vrot.lane.b32.xlu0 %v809, 5
        %v950 = vpop.permute.xlu0 %949
        %951 = vrot.lane.b32.xlu0 %v814, 5
        %v952 = vpop.permute.xlu0 %951
        %953 = vrot.lane.b32.xlu0 %v819, 5
        %v954 = vpop.permute.xlu0 %953
        %963 = vrot.lane.b32.xlu0 %v909, 14
        %v964 = vpop.permute.xlu0 %963
        %965 = vrot.lane.b32.xlu0 %v914, 14
        %v966 = vpop.permute.xlu0 %965
        %967 = vrot.lane.b32.xlu0 %v919, 14
        %v968 = vpop.permute.xlu0 %967
        %969 = vrot.lane.b32.xlu0 %v924, 14
        %v970 = vpop.permute.xlu0 %969
        %vm975 = vcmask 7168
        %v976 = vsel %vm975, %v593, %v932
        %v977 = vsel %vm975, %v598, %v934
        %v978 = vsel %vm975, %v603, %v936
        %v979 = vsel %vm975, %v608, %v938
        %vm980 = vcmask 39936
        %v981 = vsel %vm980, %v976, %v948
        %v982 = vsel %vm980, %v977, %v950
        %v983 = vsel %vm980, %v978, %v952
        %v984 = vsel %vm980, %v979, %v954
        %vm985 = vcmask 113664
        %v986 = vsel %vm985, %v981, %v964
        %v987 = vsel %vm985, %v982, %v966
        %v988 = vsel %vm985, %v983, %v968
        %v989 = vsel %vm985, %v984, %v970
        %v990 = vld [vmem:[%s345] sm:$0xff]
        %v991 = vld [vmem:[%s345 + $0x8] sm:$0xff]
        %v992 = vld [vmem:[%s345 + $0x10] sm:$0xff]
        %v993 = vld [vmem:[%s345 + $0x18] sm:$0xff]
        %v994 = vld [vmem:[%s345 + $0x20] sm:$0xff]
        %v995 = vld [vmem:[%s345 + $0x28] sm:$0xff]
        %v996 = vld [vmem:[%s345 + $0x30] sm:$0xff]
        %vm997 = vcmask 457728
        %v999 = vsel %vm997, %v986, 0
        %v1002 = vsel %vm997, %v987, 0
        %v1005 = vsel %vm997, %v988, 0
        %v1008 = vsel %vm997, %v989, 0
        %1010 = vmatprep.subr.mxu0 0.0
        %1011 = vmatpush1.msra.mxu0 %v990
        %1012 = vmatprep.subr.mxu0 0.0
        %1013 = vmatpush1.msra.mxu0 %v991
        %1014 = vmatprep.subr.mxu0 0.0
        %1015 = vmatpush1.msra.mxu0 %v992
        %1016 = vmatprep.subr.mxu0 0.0
        %1017 = vmatpush1.msra.mxu0 %v993
        %1018 = vmatprep.subr.mxu0 0.0
        %1019 = vmatpush1.msra.mxu0 %v994
        %1020 = vmatprep.subr.mxu0 0.0
        %1021 = vmatpush1.msra.mxu0 %v995
        %1022 = vmatprep.subr.mxu0 0.0
        %1023 = vmatpush1.msra.mxu0 %v996
        %1024 = vmatprep.subr.mxu0 0.0
        %1025 = vmatpush1.msra.mxu0 0.0
        %1026 = vmatprep.subr.mxu0 0.0
        %1027 = vmatpush1.msra.mxu0 0.0
        %1028 = vmatprep.subr.mxu0 0.0
        %1029 = vmatpush1.msra.mxu0 0.0
        %1030 = vmatprep.subr.mxu0 0.0
        %1031 = vmatpush1.msra.mxu0 0.0
        %1032 = vmatprep.subr.mxu0 0.0
        %1033 = vmatpush1.msra.mxu0 0.0
        %1034 = vmatprep.subr.mxu0 0.0
        %1035 = vmatpush1.msra.mxu0 0.0
        %1036 = vmatprep.subr.mxu0 0.0
        %1037 = vmatpush1.msra.mxu0 0.0
        %1038 = vmatprep.subr.mxu0 0.0
        %1039 = vmatpush1.msra.mxu0 0.0
        %1040 = vmatprep.subr.mxu0 0.0
        %1041 = vmatpush1.msra.mxu0 0.0
        %1042 = vmatprep.subr.mxu0 0.0
        %1043 = vmatpush1.msra.mxu0 0.0
        %1044 = vmatprep.subr.mxu0 0.0
        %1045 = vmatpush1.msra.mxu0 0.0
        %1046 = vmatprep.subr.mxu0 0.0
        %1047 = vmatpush1.msra.mxu0 0.0
        %1048 = vmatprep.subr.mxu0 0.0
        %1049 = vmatpush1.msra.mxu0 0.0
        %1050 = vmatprep.subr.mxu0 0.0
        %1051 = vmatpush1.msra.mxu0 0.0
        %1052 = vmatprep.subr.mxu0 0.0
        %1053 = vmatpush1.msra.mxu0 0.0
        %1054 = vmatprep.subr.mxu0 0.0
        %1055 = vmatpush1.msra.mxu0 0.0
        %1056 = vmatprep.subr.mxu0 0.0
        %1057 = vmatpush1.msra.mxu0 0.0
        %1058 = vmatprep.subr.mxu0 0.0
        %1059 = vmatpush1.msra.mxu0 0.0
        %1060 = vmatprep.subr.mxu0 0.0
        %1061 = vmatpush1.msra.mxu0 0.0
        %1062 = vmatprep.subr.mxu0 0.0
        %1063 = vmatpush1.msra.mxu0 0.0
        %1064 = vmatprep.subr.mxu0 0.0
        %1065 = vmatpush1.msra.mxu0 0.0
        %1066 = vmatprep.subr.mxu0 0.0
        %1067 = vmatpush1.msra.mxu0 0.0
        %1068 = vmatprep.subr.mxu0 0.0
        %1069 = vmatpush1.msra.mxu0 0.0
        %1070 = vmatprep.subr.mxu0 0.0
        %1071 = vmatpush1.msra.mxu0 0.0
        %1072 = vmatprep.subr.mxu0 0.0
        %1073 = vmatpush1.msra.mxu0 0.0
        %1074 = vmatprep.mubr.f32.mxu0 0.0
        %1075 = vmatmul.mubr.f32.gmra.mrb[0].mxu0 %v999
        %v1076 = vpop.f32.mrb[0].mxu0
        %v1077 = vadd.f32 0.0, %v1076
        %v1078 = vpop.f32.mrb[0].mxu0
        %1079 = vmatprep.mubr.f32.mxu0 0.0
        %1080 = vmatmul.mubr.f32.gmra.mrb[0].mxu0 %v1002
        %v1081 = vpop.f32.mrb[0].mxu0
        %v1082 = vadd.f32 0.0, %v1081
        %v1083 = vpop.f32.mrb[0].mxu0
        %1084 = vmatprep.mubr.f32.mxu0 0.0
        %1085 = vmatmul.mubr.f32.gmra.mrb[0].mxu0 %v1005
        %v1086 = vpop.f32.mrb[0].mxu0
        %v1087 = vadd.f32 0.0, %v1086
        %v1088 = vpop.f32.mrb[0].mxu0
        %1089 = vmatprep.mubr.f32.mxu0 0.0
        %1090 = vmatmul.mubr.f32.gmra.mrb[0].mxu0 %v1008
        %v1091 = vpop.f32.mrb[0].mxu0
        %v1092 = vadd.f32 0.0, %v1091
        %v1093 = vpop.f32.mrb[0].mxu0
        %1094 = vdwg.mxu0
        %v1096 = vsel %vm513, %v403, 0
        %v1099 = vsel %vm513, %v404, 0
        %v1102 = vsel %vm513, %v405, 0
        %v1105 = vsel %vm513, %v406, 0
        %1107 = vmatprep.subr.mxu0 0.0
        %1108 = vmatpush1.msra.mxu0 %v402
        %1109 = vmatprep.subr.mxu0 0.0
        %1110 = vmatpush1.msra.mxu0 0.0
        %1111 = vmatprep.subr.mxu0 0.0
        %1112 = vmatpush1.msra.mxu0 0.0
        %1113 = vmatprep.subr.mxu0 0.0
        %1114 = vmatpush1.msra.mxu0 0.0
        %1115 = vmatprep.subr.mxu0 0.0
        %1116 = vmatpush1.msra.mxu0 0.0
        %1117 = vmatprep.subr.mxu0 0.0
        %1118 = vmatpush1.msra.mxu0 0.0
        %1119 = vmatprep.subr.mxu0 0.0
        %1120 = vmatpush1.msra.mxu0 0.0
        %1121 = vmatprep.subr.mxu0 0.0
        %1122 = vmatpush1.msra.mxu0 0.0
        %1123 = vmatprep.subr.mxu0 0.0
        %1124 = vmatpush1.msra.mxu0 0.0
        %1125 = vmatprep.subr.mxu0 0.0
        %1126 = vmatpush1.msra.mxu0 0.0
        %1127 = vmatprep.subr.mxu0 0.0
        %1128 = vmatpush1.msra.mxu0 0.0
        %1129 = vmatprep.subr.mxu0 0.0
        %1130 = vmatpush1.msra.mxu0 0.0
        %1131 = vmatprep.subr.mxu0 0.0
        %1132 = vmatpush1.msra.mxu0 0.0
        %1133 = vmatprep.subr.mxu0 0.0
        %1134 = vmatpush1.msra.mxu0 0.0
        %1135 = vmatprep.subr.mxu0 0.0
        %1136 = vmatpush1.msra.mxu0 0.0
        %1137 = vmatprep.subr.mxu0 0.0
        %1138 = vmatpush1.msra.mxu0 0.0
        %1139 = vmatprep.subr.mxu0 0.0
        %1140 = vmatpush1.msra.mxu0 0.0
        %1141 = vmatprep.subr.mxu0 0.0
        %1142 = vmatpush1.msra.mxu0 0.0
        %1143 = vmatprep.subr.mxu0 0.0
        %1144 = vmatpush1.msra.mxu0 0.0
        %1145 = vmatprep.subr.mxu0 0.0
        %1146 = vmatpush1.msra.mxu0 0.0
        %1147 = vmatprep.subr.mxu0 0.0
        %1148 = vmatpush1.msra.mxu0 0.0
        %1149 = vmatprep.subr.mxu0 0.0
        %1150 = vmatpush1.msra.mxu0 0.0
        %1151 = vmatprep.subr.mxu0 0.0
        %1152 = vmatpush1.msra.mxu0 0.0
        %1153 = vmatprep.subr.mxu0 0.0
        %1154 = vmatpush1.msra.mxu0 0.0
        %1155 = vmatprep.subr.mxu0 0.0
        %1156 = vmatpush1.msra.mxu0 0.0
        %1157 = vmatprep.subr.mxu0 0.0
        %1158 = vmatpush1.msra.mxu0 0.0
        %1159 = vmatprep.subr.mxu0 0.0
        %1160 = vmatpush1.msra.mxu0 0.0
        %1161 = vmatprep.subr.mxu0 0.0
        %1162 = vmatpush1.msra.mxu0 0.0
        %1163 = vmatprep.subr.mxu0 0.0
        %1164 = vmatpush1.msra.mxu0 0.0
        %1165 = vmatprep.subr.mxu0 0.0
        %1166 = vmatpush1.msra.mxu0 0.0
        %1167 = vmatprep.subr.mxu0 0.0
        %1168 = vmatpush1.msra.mxu0 0.0
        %1169 = vmatprep.subr.mxu0 0.0
        %1170 = vmatpush1.msra.mxu0 0.0
        %1171 = vmatprep.mubr.f32.mxu0 0.0
        %1172 = vmatmul.mubr.f32.gmra.mrb[0].mxu0 %v1096
        %v1173 = vpop.f32.mrb[0].mxu0
        %v1174 = vadd.f32 %v1077, %v1173
        %v1175 = vpop.f32.mrb[0].mxu0
        %1176 = vmatprep.mubr.f32.mxu0 0.0
        %1177 = vmatmul.mubr.f32.gmra.mrb[0].mxu0 %v1099
        %v1178 = vpop.f32.mrb[0].mxu0
        %v1179 = vadd.f32 %v1082, %v1178
        %v1180 = vpop.f32.mrb[0].mxu0
        %1181 = vmatprep.mubr.f32.mxu0 0.0
        %1182 = vmatmul.mubr.f32.gmra.mrb[0].mxu0 %v1102
        %v1183 = vpop.f32.mrb[0].mxu0
        %v1184 = vadd.f32 %v1087, %v1183
        %v1185 = vpop.f32.mrb[0].mxu0
        %1186 = vmatprep.mubr.f32.mxu0 0.0
        %1187 = vmatmul.mubr.f32.gmra.mrb[0].mxu0 %v1105
        %v1188 = vpop.f32.mrb[0].mxu0
        %v1189 = vadd.f32 %v1092, %v1188
        %v1190 = vpop.f32.mrb[0].mxu0
        %1191 = vdwg.mxu0
        %v1192 = vld [vmem:[%s6] sm:$0xff]
        %v1193 = vld [vmem:[%s6 + $0x8] sm:$0xff]
        %v1194 = vld [vmem:[%s6 + $0x10] sm:$0xff]
        %v1195 = vld [vmem:[%s6 + $0x18] sm:$0xff]
        %1197 = vset.pattern.permute.xlu0 0
        %1198 = vperm.xlu0 %1197, %v1192
        %v1199 = vpop.permute.xlu0 %1198
        %1202 = vset.pattern.permute.xlu0 0
        %1203 = vperm.xlu0 %1202, %v1193
        %v1204 = vpop.permute.xlu0 %1203
        %1207 = vset.pattern.permute.xlu0 0
        %1208 = vperm.xlu0 %1207, %v1194
        %v1209 = vpop.permute.xlu0 %1208
        %1212 = vset.pattern.permute.xlu0 0
        %1213 = vperm.xlu0 %1212, %v1195
        %v1214 = vpop.permute.xlu0 %1213
        %v1216 = vadd.f32 %v1174, %v1199
        %v1217 = vadd.f32 %v1179, %v1204
        %v1218 = vadd.f32 %v1184, %v1209
        %v1219 = vadd.f32 %v1189, %v1214
        %v1220 = vmax.f32 %v1216, 0.0
        %v1221 = vmax.f32 %v1217, 0.0
        %v1222 = vmax.f32 %v1218, 0.0
        %v1223 = vmax.f32 %v1219, 0.0
        %1224 = vst [vmem:[%s386] sm:$0xff] %v1220
        %1225 = vst [vmem:[%s386 + $0x8] sm:$0xff] %v1221
        %1226 = vst [vmem:[%s386 + $0x10] sm:$0xff] %v1222
        %1227 = vst [vmem:[%s386 + $0x18] sm:$0xff] %v1223
        %s1228 = sand.u32 %s207, 1
        %s1229 = scalar_lea.sflag [#allocation4], %s1228
        %s1230 = sand.u32 %s207, 1
        %s1231 = smul.addr %s1230, 32
        %s1232 = scalar_lea.vmem [#allocation3], %s1231
        // Predicated region
        $region87: #{tpu_custom_call.1} parent=81 // pred_check
          %p1233 = pneg %p217
        $region88: #{tpu_custom_call.1} parent=81 // pred_check_branch
          %1235 = sbr.rel (%p1233) target = $region90
        $region89: #{tpu_custom_call.1} parent=81 // pred_region
          %s1237 = ssub.s32 512, 512
          %1238 = vsyncadd %s1229, %s1237
          %s1239 = smul.addr %s25, 8
          %s1240 = sadd.s32 %s26, %s1239
          %s1241 = smul.addr %s1240, 128
          %s1242 = scalar_lea.hbm %s7, %s1241
          %s1243 = sshll.u32 %s1232, 4
          %s1244 = int_to_ptr.vmem [resolvable:$true] %s1243
          %1249 = dma.vmem_to_hbm [thread:$0]  %s1244, 512, %s1242, %s1229, 128, 256, 8
        $region90: #{tpu_custom_call.1} parent=81 // pred_fallthru
          _
      $region82: #{tpu_custom_call.1} parent=5 // pred_fallthru
        _
      %p1250 = scmp.le.s32.totalorder 2, %s16
      // Predicated region
      $region91: #{tpu_custom_call.1} parent=5 // pred_check
        %p1251 = pneg %p1250
      $region92: #{tpu_custom_call.1} parent=5 // pred_check_branch
        %1253 = sbr.rel (%p1251) target = $region94
      $region93: #{tpu_custom_call.1} parent=5 // pred_region
        %s1254 = ssub.s32 %s16, 2
        // Predicated region
        $region95: #{tpu_custom_call.1} parent=93 // pred_check
          %p1255 = pneg %p223
        $region96: #{tpu_custom_call.1} parent=93 // pred_check_branch
          %1257 = sbr.rel (%p1255) target = $region98
        $region97: #{tpu_custom_call.1} parent=93 // pred_region
          %s1258 = sand.u32 %s208, 1
          %s1259 = scalar_lea.sflag [#allocation4], %s1258
          %s1260 = sand.u32 %s208, 1
          %s1261 = smul.addr %s1260, 32
          %s1262 = scalar_lea.vmem [#allocation3], %s1261
          %1263 = dma.done %s1259, 512
        $region98: #{tpu_custom_call.1} parent=93 // pred_fallthru
          _
      $region94: #{tpu_custom_call.1} parent=5 // pred_fallthru
        _
    $region6: #{tpu_custom_call.1} parent=1 // loop_footer
      %s20 = sadd.s32 1, %s16
    $region7: #{tpu_custom_call.1} parent=1 // loop_footer_branch
      %15 = sbr.rel target = $region3
    $region8: #{tpu_custom_call.1} parent=1 // loop_exit
      _
    %1264 = vsyncpa [#allocation4], 1
    %s1265 = scalar_lea.sflag [#allocation4], 1
    %1266 = vsyncpa %s1265, 1

</llo_original>
